<compile_context>
chip_gen: v5e
topology: v5e:2x2
jax: 0.10.0
libtpu: 0.0.40
codegen_flags: <defaults>
</compile_context>

<pallas_src>
import functools

import jax
import jax.numpy as jnp
from jax.experimental import pallas as pl
from jax.experimental.pallas import tpu as pltpu


def _round_up(x, m):
    return (x + m - 1) // m * m


def _at_loss_kernel(logits_ref, labels_ref, out_ref, *, n_true, tile_n):
    """One batch tile -> lane-dense partial loss sum written to (1, 128)."""
    logits = logits_ref[...].astype(jnp.float32)      # (tile_n, C)
    labels = labels_ref[...].astype(jnp.float32)      # (tile_n, C)
    tn, c = logits.shape

    # Column mask built once at (1, C): class 0 is the threshold ("TH") class.
    col = jax.lax.broadcasted_iota(jnp.int32, (1, c), 1)
    not_col0 = col != 0

    labels_z = jnp.where(not_col0, labels, 0.0)       # labels[:, 0] := 0
    num_pos = jnp.sum(labels_z, axis=-1, keepdims=True)            # (tn, 1)
    pos_dot = jnp.sum(labels_z * logits, axis=-1, keepdims=True)   # (tn, 1)

    # Shared row max + one exp pass feeds both restricted logsumexps.
    m_all = jnp.max(logits, axis=-1, keepdims=True)                # (tn, 1)
    e = jnp.exp(logits - m_all)                                    # (tn, C)
    pos = labels_z > 0.0
    sum_pos = jnp.sum(jnp.where(pos, e, 0.0), axis=-1, keepdims=True)
    sum_neg = jnp.sum(jnp.where(pos, 0.0, e), axis=-1, keepdims=True)  # incl. TH
    e0 = e[:, 0:1]

    lse1 = m_all + jnp.log(sum_pos + e0)     # logsumexp over {positives, TH}
    lse2 = m_all + jnp.log(sum_neg)          # logsumexp over {negatives, TH}

    # loss1 = -sum(labels * log_softmax(logit1)) = lse1 * #pos - sum(labels*logits)
    loss1 = lse1 * num_pos - pos_dot
    # loss2 = -log_softmax(logit2)[:, 0] = lse2 - logits[:, 0]
    loss2 = lse2 - logits[:, 0:1]

    # Mask out rows of the (possibly partial) final tile so the mean is unbiased.
    row = jax.lax.broadcasted_iota(jnp.int32, (tn, 1), 0)
    valid = (pl.program_id(0) * tile_n + row) < n_true
    partial = jnp.sum(jnp.where(valid, loss1 + loss2, 0.0))

    out_ref[...] = jnp.full((1, 128), partial, dtype=jnp.float32)


def _sublane(dtype):
    # Required second-minor alignment for packed dtypes (f32:8, bf16:16, i8:32).
    return max(8, 32 // max(1, jnp.dtype(dtype).itemsize))


def at_loss(logits, labels, *, tile_n=1024):
    """Pallas ATLoss forward. logits, labels: (N, C). Returns scalar f32 loss."""
    n, c = logits.shape
    assert labels.shape == (n, c)

    # Per-generation VMEM budget (v7x: 64 MiB/TC, v5e/v6e: 128 MiB/TC).
    try:
        info = pltpu.get_tpu_info()
        vmem_cap = int(getattr(info, "vmem_capacity_bytes", 64 * 1024 * 1024))
    except Exception:
        vmem_cap = 64 * 1024 * 1024
    if vmem_cap >= 96 * 1024 * 1024:
        tile_budget, vmem_limit = 48 * 1024 * 1024, 96 * 1024 * 1024
    else:
        tile_budget, vmem_limit = 24 * 1024 * 1024, 40 * 1024 * 1024

    align = max(_sublane(logits.dtype), _sublane(labels.dtype))

    # Rough per-row footprint: up to 3 pipeline buffers per input + f32 temps.
    row_bytes = c * (3 * (logits.dtype.itemsize + labels.dtype.itemsize) + 6 * 4)
    tile_cap = max(align, tile_budget // row_bytes // align * align)
    tile_n = max(align,
                 min(_round_up(tile_n, align), tile_cap, _round_up(n, align)))

    num_tiles = pl.cdiv(n, tile_n)

    # Deeper pipelining when per-step DMAs are small (latency-limited).
    block_bytes = tile_n * c * logits.dtype.itemsize
    spec_kwargs = {}
    if num_tiles >= 3 and block_bytes <= (1 << 20):
        spec_kwargs["pipeline_mode"] = pl.Buffered(3)

    kernel = functools.partial(_at_loss_kernel, n_true=n, tile_n=tile_n)

    partials = pl.pallas_call(
        kernel,
        out_shape=jax.ShapeDtypeStruct((num_tiles, 128), jnp.float32),
        grid_spec=pltpu.PrefetchScalarGridSpec(
            num_scalar_prefetch=0,
            grid=(num_tiles,),
            in_specs=[
                pl.BlockSpec((tile_n, c), lambda i: (i, 0), **spec_kwargs),
                pl.BlockSpec((tile_n, c), lambda i: (i, 0), **spec_kwargs),
            ],
            out_specs=pl.BlockSpec((1, 128), lambda i: (i, 0)),
        ),
        compiler_params=pltpu.CompilerParams(
            dimension_semantics=("parallel",),
            vmem_limit_bytes=vmem_limit,
        ),
    )(logits, labels)

    # Each tile broadcasts its partial sum across 128 lanes; take lane 0.
    return jnp.sum(partials[:, 0]) / jnp.float32(n)


def _at_loss_reference(logits, labels):
    # Pure-JAX reference mirroring the PyTorch forward() semantics.
    logits = logits.astype(jnp.float32)
    labels = labels.astype(jnp.float32)
    th_label = jnp.zeros_like(labels).at[:, 0].set(1.0)
    labels = labels.at[:, 0].set(0.0)
    p_mask = labels + th_label
    n_mask = 1.0 - labels
    logit1 = logits - (1.0 - p_mask) * 1e30
    loss1 = -(jax.nn.log_softmax(logit1, axis=-1) * labels).sum(1)
    logit2 = logits - (1.0 - n_mask) * 1e30
    loss2 = -(jax.nn.log_softmax(logit2, axis=-1) * th_label).sum(1)
    return (loss1 + loss2).mean()


# TODO(synk): ATLoss.get_label (top-k based inference helper) is not part of
# forward() and is not translated here.

if __name__ == "__main__":
    key = jax.random.PRNGKey(0)
    k1, k2, k3, k4 = jax.random.split(key, 4)

    # Small shape consistent with the module: batch=8, 32 classes (class 0 = TH).
    N, C = 8, 32
    logits = jax.random.normal(k1, (N, C), dtype=jnp.float32)
    labels = (jax.random.uniform(k2, (N, C)) < 0.3).astype(jnp.float32)

    loss = at_loss(logits, labels)
    jax.block_until_ready(loss)
    ref = _at_loss_reference(logits, labels)
    assert jnp.allclose(loss, ref, rtol=1e-4, atol=1e-4), (loss, ref)

    # Ragged multi-tile case: N-tiling, partial final block, non-128 C,
    # and the deeper Buffered(3) input pipeline.
    N2, C2 = 50, 97
    logits2 = jax.random.normal(k3, (N2, C2), dtype=jnp.float32)
    labels2 = (jax.random.uniform(k4, (N2, C2)) < 0.2).astype(jnp.float32)

    loss_b = at_loss(logits2, labels2, tile_n=16)
    jax.block_until_ready(loss_b)
    ref_b = _at_loss_reference(logits2, labels2)
    assert jnp.allclose(loss_b, ref_b, rtol=1e-4, atol=1e-4), (loss_b, ref_b)

    # Narrow-dtype input path: bf16 logits streamed as-is, upcast in-kernel.
    logits_bf16 = logits2.astype(jnp.bfloat16)
    loss_c = at_loss(logits_bf16, labels2)
    jax.block_until_ready(loss_c)
    ref_c = _at_loss_reference(logits_bf16, labels2)
    assert jnp.allclose(loss_c, ref_c, rtol=1e-3, atol=1e-3), (loss_c, ref_c)

    print("KERNEL_OK")
</pallas_src>

<mosaic_0001>
module attributes {stable_mosaic.version = 11 : i64} {
  func.func @_at_loss_kernel(%arg0: i32, %arg1: memref<8x32xf32, #tpu.memory_space<vmem>>, %arg2: memref<8x32xf32, #tpu.memory_space<vmem>>, %arg3: memref<1x128xf32, #tpu.memory_space<vmem>>) attributes {dimension_semantics = [#tpu.dimension_semantics<parallel>], iteration_bounds = array<i64: 1>, scalar_prefetch = 0 : i64, scratch_operands = 0 : i64, tpu.core_type = #tpu.core_type<tc>, window_params = [{transform_indices = @transform_0, window_bounds = array<i64: 8, 32>}, {transform_indices = @transform_1, window_bounds = array<i64: 8, 32>}, {transform_indices = @transform_2, window_bounds = array<i64: 1, 128>}]} {
    %c0 = arith.constant 0 : index
    %c0_0 = arith.constant 0 : index
    %0 = vector.load %arg1[%c0, %c0_0] : memref<8x32xf32, #tpu.memory_space<vmem>>, vector<8x32xf32>
    %c0_1 = arith.constant 0 : index
    %c0_2 = arith.constant 0 : index
    %1 = vector.load %arg2[%c0_1, %c0_2] : memref<8x32xf32, #tpu.memory_space<vmem>>, vector<8x32xf32>
    %2 = tpu.iota {dimensions = array<i32: 1>} : vector<1x32xi32>
    %c0_i32 = arith.constant 0 : i32
    %3 = vector.broadcast %c0_i32 : i32 to vector<1x32xi32>
    %4 = arith.cmpi ne, %2, %3 : vector<1x32xi32>
    %cst = arith.constant 0.000000e+00 : f32
    %5 = vector.shape_cast %4 : vector<1x32xi1> to vector<1x32xi1>
    %6 = vector.broadcast %5 : vector<1x32xi1> to vector<8x32xi1>
    %7 = vector.broadcast %cst : f32 to vector<8x32xf32>
    %8 = arith.select %6, %1, %7 : vector<8x32xi1>, vector<8x32xf32>
    %cst_3 = arith.constant dense<0.000000e+00> : vector<8xf32>
    %9 = vector.multi_reduction <add>, %8, %cst_3 [1] : vector<8x32xf32> to vector<8xf32>
    %10 = vector.shape_cast %9 : vector<8xf32> to vector<8x1xf32>
    %11 = arith.mulf %8, %0 : vector<8x32xf32>
    %cst_4 = arith.constant dense<0.000000e+00> : vector<8xf32>
    %12 = vector.multi_reduction <add>, %11, %cst_4 [1] : vector<8x32xf32> to vector<8xf32>
    %13 = vector.shape_cast %12 : vector<8xf32> to vector<8x1xf32>
    %cst_5 = arith.constant dense<0xFF800000> : vector<8xf32>
    %14 = vector.multi_reduction <maximumf>, %0, %cst_5 [1] : vector<8x32xf32> to vector<8xf32>
    %15 = vector.shape_cast %14 : vector<8xf32> to vector<8x1xf32>
    %16 = vector.broadcast %15 : vector<8x1xf32> to vector<8x32xf32>
    %17 = arith.subf %0, %16 : vector<8x32xf32>
    %18 = math.exp %17 : vector<8x32xf32>
    %cst_6 = arith.constant 0.000000e+00 : f32
    %19 = vector.broadcast %cst_6 : f32 to vector<8x32xf32>
    %20 = arith.cmpf ogt, %8, %19 : vector<8x32xf32>
    %cst_7 = arith.constant 0.000000e+00 : f32
    %21 = vector.broadcast %cst_7 : f32 to vector<8x32xf32>
    %22 = arith.select %20, %18, %21 : vector<8x32xi1>, vector<8x32xf32>
    %cst_8 = arith.constant dense<0.000000e+00> : vector<8xf32>
    %23 = vector.multi_reduction <add>, %22, %cst_8 [1] : vector<8x32xf32> to vector<8xf32>
    %24 = vector.shape_cast %23 : vector<8xf32> to vector<8x1xf32>
    %cst_9 = arith.constant 0.000000e+00 : f32
    %25 = vector.broadcast %cst_9 : f32 to vector<8x32xf32>
    %26 = arith.select %20, %25, %18 : vector<8x32xi1>, vector<8x32xf32>
    %cst_10 = arith.constant dense<0.000000e+00> : vector<8xf32>
    %27 = vector.multi_reduction <add>, %26, %cst_10 [1] : vector<8x32xf32> to vector<8xf32>
    %28 = vector.shape_cast %27 : vector<8xf32> to vector<8x1xf32>
    %29 = vector.extract_strided_slice %18 {offsets = [0, 0], sizes = [8, 1], strides = [1, 1]} : vector<8x32xf32> to vector<8x1xf32>
    %30 = arith.addf %24, %29 : vector<8x1xf32>
    %31 = math.log %30 : vector<8x1xf32>
    %32 = arith.addf %15, %31 : vector<8x1xf32>
    %33 = math.log %28 : vector<8x1xf32>
    %34 = arith.addf %15, %33 : vector<8x1xf32>
    %35 = arith.mulf %32, %10 : vector<8x1xf32>
    %36 = arith.subf %35, %13 : vector<8x1xf32>
    %37 = vector.extract_strided_slice %0 {offsets = [0, 0], sizes = [8, 1], strides = [1, 1]} : vector<8x32xf32> to vector<8x1xf32>
    %38 = arith.subf %34, %37 : vector<8x1xf32>
    %39 = tpu.iota {dimensions = array<i32: 0>} : vector<8x1xi32>
    %c8_i32 = arith.constant 8 : i32
    %40 = arith.muli %arg0, %c8_i32 : i32
    %41 = vector.broadcast %40 : i32 to vector<8x1xi32>
    %42 = arith.addi %41, %39 : vector<8x1xi32>
    %c8_i32_11 = arith.constant 8 : i32
    %43 = vector.broadcast %c8_i32_11 : i32 to vector<8x1xi32>
    %44 = arith.cmpi slt, %42, %43 : vector<8x1xi32>
    %45 = arith.addf %36, %38 : vector<8x1xf32>
    %cst_12 = arith.constant 0.000000e+00 : f32
    %46 = vector.broadcast %cst_12 : f32 to vector<8x1xf32>
    %47 = arith.select %44, %45, %46 : vector<8x1xi1>, vector<8x1xf32>
    %48 = vector.shape_cast %47 : vector<8x1xf32> to vector<1x8x1xf32>
    %cst_13 = arith.constant dense<0.000000e+00> : vector<1xf32>
    %49 = vector.multi_reduction <add>, %48, %cst_13 [1, 2] : vector<1x8x1xf32> to vector<1xf32>
    %50 = vector.shape_cast %49 : vector<1xf32> to vector<1x1x1xf32>
    %51 = vector.extract %50[0, 0, 0] : f32 from vector<1x1x1xf32>
    %52 = vector.broadcast %51 : f32 to vector<1x128xf32>
    %c0_14 = arith.constant 0 : index
    %c0_15 = arith.constant 0 : index
    %53 = vector.load %arg3[%c0_14, %c0_15] : memref<1x128xf32, #tpu.memory_space<vmem>>, vector<1x128xf32>
    tpu.vector_store %arg3[%c0_14, %c0_15], %52 {strides = array<i32>} : memref<1x128xf32, #tpu.memory_space<vmem>>, vector<1x128xf32>,
    return
  }
  func.func @transform_0(%arg0: i32) -> (i32, i32) {
    %c0_i32 = arith.constant 0 : i32
    %c0_i32_0 = arith.constant 0 : i32
    return %arg0, %c0_i32 : i32, i32
  }
  func.func @transform_1(%arg0: i32) -> (i32, i32) {
    %c0_i32 = arith.constant 0 : i32
    %c0_i32_0 = arith.constant 0 : i32
    return %arg0, %c0_i32 : i32, i32
  }
  func.func @transform_2(%arg0: i32) -> (i32, i32) {
    %c0_i32 = arith.constant 0 : i32
    %c0_i32_0 = arith.constant 0 : i32
    return %arg0, %c0_i32 : i32, i32
  }
}

</mosaic_0001>

<llo_original>
// kernel: tpu_custom_call.1
$region0: #{tpu_custom_call.1}
  #allocation0 [shape = 'u32[]', space=smem, size = 0x4, offset = 0x4, fixed_abs, tag = 'smem constant byte address 0x4 - core index']
  #allocation1 [shape = 'u32[72,128]{1,0:T(1,128)}', space=vmem, size = 0x9000, scoped, tag = 'internal scratch']
  %s0 = inlined_call_operand.hbm [shape: f32[8,32], index: 0, kind: input, shape index: {}]
  %s1 = inlined_call_operand.hbm [shape: f32[8,32], index: 1, kind: input, shape index: {}]
  %s2 = inlined_call_operand.hbm [shape: f32[1,128], index: 2, kind: output, shape index: {}]
  %s3 = sld [smem:[#allocation0]]
  $region26: #{tpu_custom_call.1} parent=0
    _
  %s5 = ssub.s32 1, %s3
  %s6 = scalar_select 0, %s5, %s3
  $region1: #{tpu_custom_call.1} parent=0
    #allocation2 [shape = 'u8[4096]{0}', space=vmem, size = 0x1000, scoped, tag = 'input window, operand 0, single buffered']
    #allocation3 [shape = 's32[1]{0}', space=sflag, size = 0x4, scoped, tag = 'scoped memory for tpu_custom_call.1']
    #allocation4 [shape = 's32[1]{0}', space=sflag, size = 0x4, scoped, tag = 'scoped memory for tpu_custom_call.1']
    #allocation5 [shape = 'u8[4096]{0}', space=vmem, size = 0x1000, scoped, tag = 'input window, operand 1, single buffered']
    #allocation6 [shape = 's32[1]{0}', space=sflag, size = 0x4, scoped, tag = 'scoped memory for tpu_custom_call.1']
    #allocation7 [shape = 'u8[512]{0}', space=vmem, size = 0x400, scoped, tag = 'output window, operand 0, single buffered']
    %7 = vsyncpa [#allocation3], 0
    %8 = vsyncpa [#allocation6], 0
    %9 = vsyncpa [#allocation4], 0
    // Predicated region
    $region2: #{tpu_custom_call.1} parent=1 // pred_check
      _
    $region3: #{tpu_custom_call.1} parent=1 // pred_check_branch
      %11 = sbr.rel (0) target = $region5
    $region4: #{tpu_custom_call.1} parent=1 // pred_region
      %13 = vsyncadd [#allocation3], 0
      %s15 = sshll.u32 %s0, 4
      %s16 = int_to_ptr.hbm [resolvable:$true] %s15
      %s17 = sshll.u32 [#allocation2], 4
      %s18 = int_to_ptr.vmem [resolvable:$true] %s17
      %20 = dma.hbm_to_vmem [thread:$0]  %s16, 128, %s18, [#allocation3]
    $region5: #{tpu_custom_call.1} parent=1 // pred_fallthru
      _
    // Predicated region
    $region6: #{tpu_custom_call.1} parent=1 // pred_check
      _
    $region7: #{tpu_custom_call.1} parent=1 // pred_check_branch
      %22 = sbr.rel (0) target = $region9
    $region8: #{tpu_custom_call.1} parent=1 // pred_region
      %24 = vsyncadd [#allocation6], 0
      %s26 = sshll.u32 %s1, 4
      %s27 = int_to_ptr.hbm [resolvable:$true] %s26
      %s28 = sshll.u32 [#allocation5], 4
      %s29 = int_to_ptr.vmem [resolvable:$true] %s28
      %31 = dma.hbm_to_vmem [thread:$0]  %s27, 128, %s29, [#allocation6]
    $region9: #{tpu_custom_call.1} parent=1 // pred_fallthru
      _
    // Predicated region
    $region10: #{tpu_custom_call.1} parent=1 // pred_check
      _
    $region11: #{tpu_custom_call.1} parent=1 // pred_check_branch
      %33 = sbr.rel (0) target = $region13
    $region12: #{tpu_custom_call.1} parent=1 // pred_region
      %35 = dma.done [#allocation3], 128
    $region13: #{tpu_custom_call.1} parent=1 // pred_fallthru
      _
    // Predicated region
    $region14: #{tpu_custom_call.1} parent=1 // pred_check
      _
    $region15: #{tpu_custom_call.1} parent=1 // pred_check_branch
      %37 = sbr.rel (0) target = $region17
    $region16: #{tpu_custom_call.1} parent=1 // pred_region
      %39 = dma.done [#allocation6], 128
    $region17: #{tpu_custom_call.1} parent=1 // pred_fallthru
      _
    %v40 = vld [vmem:[#allocation2] sm:$0xff]
    %v41 = vld [vmem:[#allocation5] sm:$0xff]
    %v42 = vlaneseq
    %v43 = vand.u32 %v42, 127
    %vm44 = vcmp.ne.s32.totalorder %v43, 0
    %v45 = vsel %vm44, 1, 0
    %vm46 = vcmp.eq.s32.totalorder %v45, 1
    %v47 = vsel %vm46, %v41, 0.0
    %vm48 = vcmask 261120
    %v49 = vsel %vm48, %v47, 0.0
    %50 = vadd.xlane.f32.xlu0 %v49
    %v51 = vpop.xlane.xlu0 %50
    %v52 = vmul.f32 %v47, %v40
    %v53 = vsel %vm48, %v52, 0.0
    %54 = vadd.xlane.f32.xlu0 %v53
    %v55 = vpop.xlane.xlu0 %54
    %v56 = vsel %vm48, %v40, -inf
    %57 = vmax.xlane.f32.xlu0 %v56
    %v58 = vpop.xlane.xlu0 %57
    %v59 = vsub.f32 %v40, %v58
    %v60 = vmul.f32 %v59, 1.442695
    %v61 = vpow.pop %v60
    %vm62 = vcmp.gt.f32.partialorder %v47, 0.0
    %v63 = vsel %vm62, %v61, 0.0
    %v64 = vsel %vm48, %v63, 0.0
    %65 = vadd.xlane.f32.xlu0 %v64
    %v66 = vpop.xlane.xlu0 %65
    %v67 = vsel %vm62, 0.0, %v61
    %v68 = vsel %vm48, %v67, 0.0
    %69 = vadd.xlane.f32.xlu0 %v68
    %v70 = vpop.xlane.xlu0 %69
    %v71 = vadd.f32 %v66, %v61
    %v72 = vlog2.pop %v71
    %v73 = vmul.f32 %v72, 0.6931472
    %v74 = vadd.f32 %v58, %v73
    %v75 = vlog2.pop %v70
    %v76 = vmul.f32 %v75, 0.6931472
    %v77 = vadd.f32 %v58, %v76
    %v78 = vmul.f32 %v74, %v51
    %v79 = vsub.f32 %v78, %v55
    %v80 = vsub.f32 %v77, %v40
    %v81 = vlaneseq
    %v82 = vshrl.u32 %v81, 7
    %s83 = smul.u32 0, 8
    %v84 = vstv %s83
    %v85 = vadd.s32 %v84, %v82
    %vm86 = vcmp.lt.s32.totalorder %v85, 8
    %v87 = vadd.f32 %v79, %v80
    %v88 = vsel %vm86, %v87, 0.0
    %vm89 = vcmask 7168
    %v90 = vsel %vm89, %v88, 0.0
    %91 = vadd.xlane.f32.xlu0 %v90
    %v92 = vpop.xlane.xlu0 %91
    %v93 = vrot.slane %v92, 4
    %v94 = vadd.f32 %v92, %v93
    %v95 = vrot.slane %v94, 2
    %v96 = vadd.f32 %v94, %v95
    %v97 = vrot.slane %v96, 1
    %v98 = vadd.f32 %v96, %v97
    %s99 = vtos %v98
    %v100 = vstv %s99
    %101 = vst [vmem:[#allocation7] sm:$0x1] %v100
    // Predicated region
    $region18: #{tpu_custom_call.1} parent=1 // pred_check
      _
    $region19: #{tpu_custom_call.1} parent=1 // pred_check_branch
      %103 = sbr.rel (0) target = $region21
    $region20: #{tpu_custom_call.1} parent=1 // pred_region
      %105 = vsyncadd [#allocation4], 0
      %s107 = sshll.u32 [#allocation7], 4
      %s108 = int_to_ptr.vmem [resolvable:$true] %s107
      %s109 = sshll.u32 %s2, 4
      %s110 = int_to_ptr.hbm [resolvable:$true] %s109
      %112 = dma.vmem_to_hbm [thread:$0]  %s108, 16, %s110, [#allocation4]
    $region21: #{tpu_custom_call.1} parent=1 // pred_fallthru
      _
    // Predicated region
    $region22: #{tpu_custom_call.1} parent=1 // pred_check
      _
    $region23: #{tpu_custom_call.1} parent=1 // pred_check_branch
      %114 = sbr.rel (0) target = $region25
    $region24: #{tpu_custom_call.1} parent=1 // pred_region
      %116 = dma.done [#allocation4], 16
    $region25: #{tpu_custom_call.1} parent=1 // pred_fallthru
      _
    %117 = vsyncpa [#allocation3], 1
    %118 = vsyncpa [#allocation6], 1
    %119 = vsyncpa [#allocation4], 1

</llo_original>
